<compile_context>
chip_gen: v6e
topology: v6e:2x2x1
jax: 0.10.0
libtpu: 0.0.40
codegen_flags: <defaults>
</compile_context>

<pallas_src>
import math

import jax
import jax.numpy as jnp
from jax import lax
from jax.experimental import pallas as pl
from jax.experimental.pallas import tpu as pltpu

F32 = jnp.float32
BF16 = jnp.bfloat16

_VMEM_CAP = None


def _vmem_capacity_bytes():
    """Physical VMEM per TensorCore (64 MiB on v7x, 128 MiB on v5e/v6e)."""
    global _VMEM_CAP
    if _VMEM_CAP is None:
        cap = 128 << 20
        try:
            cap = int(getattr(pltpu.get_tpu_info(), "vmem_capacity_bytes", cap))
        except Exception:
            pass
        _VMEM_CAP = cap
    return _VMEM_CAP


def _vmem_budget_bytes():
    # ~38 MiB on v7x, ~76 MiB on v5e/v6e; leaves headroom for compiler scratch.
    return min(96 << 20, int(_vmem_capacity_bytes() * 0.6))


def _round_up(x, m):
    return ((x + m - 1) // m) * m


def _pick_bt(B, bt_max=8):
    """Largest batch-block that divides B while keeping >=2 grid blocks (v7x)."""
    divisors = [d for d in range(1, B + 1) if B % d == 0 and d <= bt_max]
    two_block = [d for d in divisors if B // d >= 2]
    return max(two_block) if two_block else max(divisors)


# ----------------------------------------------------------------------------
# Conv GEMM kernel:  out[Cout, m] = act((W @ X)[Cout, m] * scale[Cout] + shift[Cout])
# Lane dim of the output is the padded M = B*Ho*Wo axis (unmasked lane-dense stores).
# ----------------------------------------------------------------------------
def _make_conv_gemm_kernel(relu):
    def kernel(w_ref, x_ref, scale_ref, shift_ref, o_ref):
        acc = jnp.dot(w_ref[...], x_ref[...], preferred_element_type=jnp.float32)
        y = acc * scale_ref[...] + shift_ref[...]
        if relu:
            y = jnp.maximum(y, 0.0)
        o_ref[...] = y.astype(o_ref.dtype)
    return kernel


_CONV_GEMM = _make_conv_gemm_kernel(False)
_CONV_GEMM_RELU = _make_conv_gemm_kernel(True)


def _pick_conv_tile(M_pad, Cout, K, out_bytes):
    cap = _vmem_capacity_bytes()
    budget = _vmem_budget_bytes()
    tn = 2048 if cap >= (100 << 20) else 1024             # per-generation ceiling
    # keep the f32 epilogue tile within ~half the vreg file (128 KiB)
    tn = min(tn, max(128, ((128 * 1024) // (4 * max(Cout, 1))) // 128 * 128))
    # double-buffered bf16 X tile + double-buffered output tile must fit the budget
    per_col = 2 * (K * 2 + Cout * out_bytes)
    tn = min(tn, max(128, (budget // max(per_col, 1)) // 128 * 128))
    tn = min(tn, M_pad)
    # ensure the "parallel" grid axis has >= 2 blocks for v7x's dual TensorCore
    if M_pad >= 256:
        tn = min(tn, _round_up(M_pad // 2, 128))
    return tn


def pallas_conv_gemm(w, x, bias=None, scale=None, shift=None, relu=False, out_dtype=F32):
    """y = act((w @ x) * scale + shift'); w:[Cout,K], x:[K,M] -> [Cout,M] (out_dtype).

    bf16 MXU operands, f32 accumulation.  Tiled over M ("parallel" axis); bias folded
    into shift' = bias*scale + shift on the host; M padded to a multiple of 128.
    """
    Cout, K = w.shape
    _, M = x.shape
    scale = jnp.ones((Cout,), F32) if scale is None else scale.astype(F32)
    shift = jnp.zeros((Cout,), F32) if shift is None else shift.astype(F32)
    if bias is not None:
        shift = bias.astype(F32) * scale + shift          # fold bias -> single FMA epilogue
    scale = scale.reshape(Cout, 1)
    shift = shift.reshape(Cout, 1)

    x = x.astype(BF16)
    M_pad = _round_up(M, 128)                             # lane-dense unmasked stores
    if M_pad != M:
        x = jnp.pad(x, ((0, 0), (0, M_pad - M)))

    out_bytes = jnp.dtype(out_dtype).itemsize
    tn = _pick_conv_tile(M_pad, Cout, K, out_bytes)
    kernel = _CONV_GEMM_RELU if relu else _CONV_GEMM
    y = pl.pallas_call(
        kernel,
        out_shape=jax.ShapeDtypeStruct((Cout, M_pad), out_dtype),
        grid=(pl.cdiv(M_pad, tn),),
        in_specs=[
            pl.BlockSpec((Cout, K), lambda j: (0, 0)),    # resident across the grid
            pl.BlockSpec((K, tn), lambda j: (0, j)),
            pl.BlockSpec((Cout, 1), lambda j: (0, 0)),
            pl.BlockSpec((Cout, 1), lambda j: (0, 0)),
        ],
        out_specs=pl.BlockSpec((Cout, tn), lambda j: (0, j)),
        compiler_params=pltpu.CompilerParams(
            dimension_semantics=("parallel",),
            vmem_limit_bytes=_vmem_budget_bytes()),
    )(w.astype(BF16), x, scale, shift)
    return y[:, :M] if M_pad != M else y


# ----------------------------------------------------------------------------
# Batched gram kernel: BT batch elements per step, all C grams  g_c = X_c @ X_c^T.
# Input is channel-major [C, B, n, n]; output is [B, C, n, n] (layout swap at DMA level).
# ----------------------------------------------------------------------------
def _make_gram_kernel(bt):
    def kernel(x_ref, o_ref):
        for b in range(bt):                               # static unroll, bt <= 8
            x = x_ref[:, b]                               # [C, n, n]
            o_ref[b] = lax.dot_general(x, x, (((2,), (2,)), ((0,), (0,))),
                                       preferred_element_type=jnp.float32)
    return kernel


def pallas_gram(xp_cm, bt):
    C, B, n, _ = xp_cm.shape
    return pl.pallas_call(
        _make_gram_kernel(bt),
        out_shape=jax.ShapeDtypeStruct((B, C, n, n), F32),
        grid=(B // bt,),
        in_specs=[pl.BlockSpec((C, bt, n, n), lambda b: (0, b, 0, 0))],
        out_specs=pl.BlockSpec((bt, C, n, n), lambda b: (b, 0, 0, 0)),
        compiler_params=pltpu.CompilerParams(
            dimension_semantics=("parallel",),
            vmem_limit_bytes=_vmem_budget_bytes()),
    )(xp_cm.astype(F32))


# ----------------------------------------------------------------------------
# GCN + channel softmax kernel, BT batch elements per step, tiled over N when large.
# Residual is folded into the weight: h = relu(x @ (W1^T + I) + b1), y = W2 @ h,
# softmax over the channel dim; divide via pl.reciprocal (EUP slot).
# ----------------------------------------------------------------------------
def _make_gcn_kernel(bt):
    def kernel(x_ref, w1ti_ref, b1_ref, w2_ref, o_ref):
        w1ti = w1ti_ref[...]                              # [N, nt] (includes +I)
        b1 = b1_ref[...]                                  # [1, nt]
        w2 = w2_ref[...]                                  # [C, C]
        for b in range(bt):                               # static unroll, bt <= 8
            x = x_ref[b]                                  # [C, N]
            h = jnp.maximum(
                jnp.dot(x, w1ti, preferred_element_type=jnp.float32) + b1, 0.0)
            y = jnp.dot(w2, h, preferred_element_type=jnp.float32)
            m = jnp.max(y, axis=0, keepdims=True)         # softmax over channel dim
            e = jnp.exp(y - m)
            o_ref[b] = e * pl.reciprocal(jnp.sum(e, axis=0, keepdims=True), approx=True)
    return kernel


def _pick_gcn_ntile(N):
    if N * N * 4 <= (8 << 20):                            # full weight resident
        return N
    budget = _vmem_budget_bytes()
    nt = max(128, ((budget // 2) // (2 * N * 4)) // 128 * 128)   # double-buffered tiles
    return min(nt, _round_up(N, 128))


def pallas_gcn_softmax(x, w1, b1, w2, bt):
    B, C, N = x.shape
    nt = _pick_gcn_ntile(N)
    ntiles = 1 if nt == N else pl.cdiv(N, nt)
    w1ti = w1.T.astype(F32) + jnp.eye(N, dtype=F32)       # fold the +x residual
    return pl.pallas_call(
        _make_gcn_kernel(bt),
        out_shape=jax.ShapeDtypeStruct((B, C, N), F32),
        grid=(B // bt, ntiles),
        in_specs=[
            pl.BlockSpec((bt, C, N), lambda b, j: (b, 0, 0)),   # resident across j
            pl.BlockSpec((N, nt), lambda b, j: (0, j)),
            pl.BlockSpec((1, nt), lambda b, j: (0, j)),
            pl.BlockSpec((C, C), lambda b, j: (0, 0)),
        ],
        out_specs=pl.BlockSpec((bt, C, nt), lambda b, j: (b, 0, j)),
        compiler_params=pltpu.CompilerParams(
            dimension_semantics=("parallel", "parallel"),
            vmem_limit_bytes=_vmem_budget_bytes()),
    )(x.astype(F32), w1ti, b1.reshape(1, N).astype(F32), w2.astype(F32))


# ----------------------------------------------------------------------------
# VID loss kernel: Gaussian-NLL reduction.  Outer "parallel" split (dual-TC partial
# sums, combined on host) x inner "arbitrary" batch reduction with a resident
# per-split accumulator block.  Inputs come straight from the GCN output [B, C, N].
# ----------------------------------------------------------------------------
def _make_vid_kernel(bt):
    def kernel(t_ref, s_ref, w_ref, b_ref, invvar_ref, logvar_ref, o_ref):
        @pl.when(pl.program_id(1) == 0)
        def _():
            o_ref[...] = jnp.zeros_like(o_ref)
        w = w_ref[...]
        b = b_ref[...]
        iv = invvar_ref[...]
        lv = logvar_ref[...]
        total = jnp.zeros((1, 1), jnp.float32)
        for bb in range(bt):                              # static unroll, bt <= 8
            t = t_ref[bb]                                 # [C, N]
            s = s_ref[bb]
            pred = jnp.dot(w, t, preferred_element_type=jnp.float32) + b
            d = pred - s
            nll = 0.5 * (d * d * iv + lv)
            total = total + jnp.sum(nll, keepdims=True)
        o_ref[...] = o_ref[...] + total                   # (1,1) broadcast into (1,128)
    return kernel


def pallas_vid(t_map, s_map, wr, br, log_scale, bt, eps=1e-5):
    B, C, N = t_map.shape
    var = jax.nn.softplus(log_scale.astype(F32)) + eps
    invvar = (1.0 / var).reshape(C, 1)
    logvar = jnp.log(var).reshape(C, 1)
    steps_total = B // bt
    split = 2 if (steps_total >= 2 and steps_total % 2 == 0) else 1
    steps = steps_total // split
    psums = pl.pallas_call(
        _make_vid_kernel(bt),
        out_shape=jax.ShapeDtypeStruct((1, split * 128), F32),
        grid=(split, steps),
        in_specs=[
            pl.BlockSpec((bt, C, N), lambda p, s: (p * steps + s, 0, 0)),
            pl.BlockSpec((bt, C, N), lambda p, s: (p * steps + s, 0, 0)),
            pl.BlockSpec((C, C), lambda p, s: (0, 0)),
            pl.BlockSpec((C, 1), lambda p, s: (0, 0)),
            pl.BlockSpec((C, 1), lambda p, s: (0, 0)),
            pl.BlockSpec((C, 1), lambda p, s: (0, 0)),
        ],
        out_specs=pl.BlockSpec((1, 128), lambda p, s: (0, p)),   # per-split accumulator
        compiler_params=pltpu.CompilerParams(
            dimension_semantics=("parallel", "arbitrary"),
            vmem_limit_bytes=_vmem_budget_bytes()),
    )(t_map.astype(F32), s_map.astype(F32), wr.astype(F32),
      br.reshape(C, 1).astype(F32), invvar, logvar)
    return jnp.sum(psums.reshape(split, 128)[:, 0]) / (B * C * N)


# ----------------------------------------------------------------------------
# Conv glue on channel-major activations (im2col is light XLA glue; GEMM is Pallas)
# ----------------------------------------------------------------------------
def conv2d_cm(x_cm, w, bias=None, stride=1, bn_scale=None, bn_shift=None, relu=False,
              out_dtype=F32):
    """PyTorch-semantics Conv2d (VALID, no dilation) on channel-major input.

    x_cm: [Cin, B, H, W]  ->  [Cout, B, Ho, Wo]  (out_dtype)
    """
    Cin, B, H, W = x_cm.shape
    Cout, _, kh, kw = w.shape
    Ho = (H - kh) // stride + 1
    Wo = (W - kw) // stride + 1
    x_cm = x_cm.astype(BF16)          # cast BEFORE im2col: amplified patches stay bf16
    if kh == 1 and kw == 1 and stride == 1:
        patches = x_cm.reshape(Cin, B * H * W)
    else:
        cols = []
        for i in range(kh):
            for j in range(kw):
                cols.append(x_cm[:, :, i:i + stride * (Ho - 1) + 1:stride,
                                       j:j + stride * (Wo - 1) + 1:stride])
        patches = jnp.stack(cols, axis=1).reshape(Cin * kh * kw, B * Ho * Wo)
    wmat = w.reshape(Cout, Cin * kh * kw)
    y = pallas_conv_gemm(wmat, patches, bias=bias, scale=bn_scale, shift=bn_shift,
                         relu=relu, out_dtype=out_dtype)
    return y.reshape(Cout, B, Ho, Wo)


# ----------------------------------------------------------------------------
# Module configuration / parameter init (deterministic)
# ----------------------------------------------------------------------------
def _inter_channel(channelin):
    inter = channelin // 16 if channelin > 320 else channelin // 2
    if channelin == 6:
        inter = channelin
    return inter


def region_cfg(channelin, size):
    inter = _inter_channel(channelin)
    rs = [3, 5, 7] if size > 16 else [1, 2, 3]
    strides = [rs[0], math.ceil(rs[1] / 2), math.ceil(rs[2] / 2)]
    if size == 256:
        rs = [5, 7, 9]
        strides = [strides[0], math.ceil(rs[1] / 2), math.ceil(rs[2] / 2)]
    nodes = [(size - rs[i]) // strides[i] + 1 for i in range(3)]
    return inter, rs, strides, nodes


def init_region(key, channelin, size):
    inter, rs, strides, nodes = region_cfg(channelin, size)
    keys = jax.random.split(key, 20)
    p = {"inter": inter, "rs": rs, "strides": strides, "nodes": nodes}
    p["reduce_w"] = 0.1 * jax.random.normal(keys[0], (inter, channelin, 1, 1), F32)
    p["reduce_b"] = 0.05 * jax.random.normal(keys[1], (inter,), F32)
    for i in range(3):
        base = 2 + 5 * i
        k = rs[i]
        N = nodes[i] * nodes[i]
        p[f"proj{i}_w"] = 0.1 * jax.random.normal(keys[base + 0], (inter, inter, k, k), F32)
        p[f"proj{i}_b"] = 0.05 * jax.random.normal(keys[base + 1], (inter,), F32)
        p[f"gcn{i}_w1"] = 0.1 * jax.random.normal(keys[base + 2], (N, N), F32)
        p[f"gcn{i}_b1"] = 0.05 * jax.random.normal(keys[base + 3], (N,), F32)
        p[f"gcn{i}_w2"] = 0.1 * jax.random.normal(keys[base + 4], (inter, inter), F32)
    return p


def init_sdgc(key, channelT, sizeT, channelS, sizeS):
    k = jax.random.split(key, 8)
    params = {}
    params["down_w"] = 0.1 * jax.random.normal(k[0], (channelS, channelT, 1, 1), F32)
    # BatchNorm2d (inference mode, PyTorch default init) folded into scale/shift.
    eps = 1e-5
    gamma = jnp.ones((channelS,), F32)
    beta = jnp.zeros((channelS,), F32)
    running_mean = jnp.zeros((channelS,), F32)
    running_var = jnp.ones((channelS,), F32)
    scale = gamma / jnp.sqrt(running_var + eps)
    params["bn_scale"] = scale
    params["bn_shift"] = beta - running_mean * scale
    params["regionT"] = init_region(k[1], channelS, sizeT)
    params["regionS"] = init_region(k[2], channelS, sizeS)
    inter = _inter_channel(channelS)
    params["vid_w"] = 0.1 * jax.random.normal(k[3], (inter, inter), F32)
    params["vid_b"] = 0.05 * jax.random.normal(k[4], (inter,), F32)
    params["vid_log_scale"] = jnp.full(
        (inter,), math.log(math.exp(5.0 - 1e-5) - 1.0), F32)   # init_pred_var = 5.0
    return params


# ----------------------------------------------------------------------------
# Forward passes
# ----------------------------------------------------------------------------
def region_forward(p, x_cm, bt):
    """x_cm: channel-major activations [C_in, B, H, W] -> list of [B, inter, N_i]."""
    _, B, _, _ = x_cm.shape
    inter = p["inter"]
    # reduce-conv output feeds bf16 proj GEMMs -> store bf16 directly from the kernel
    xr = conv2d_cm(x_cm, p["reduce_w"], bias=p["reduce_b"], stride=1,
                   out_dtype=BF16)                                        # [inter,B,H,W]
    outs = []
    for i in range(3):
        # proj output feeds the f32 gram -> keep f32
        xp = conv2d_cm(xr, p[f"proj{i}_w"], bias=p[f"proj{i}_b"],
                       stride=p["strides"][i], out_dtype=F32)             # [inter,B,n,n]
        n = xp.shape[-1]
        g = pallas_gram(xp, bt).reshape(B, inter, n * n)                  # [B,inter,N]
        sm = pallas_gcn_softmax(g, p[f"gcn{i}_w1"], p[f"gcn{i}_b1"],
                                p[f"gcn{i}_w2"], bt)
        outs.append(sm)                                                   # keep [B,C,N]
    return outs


def sdgc_forward(params, teacher, student):
    b, c, h, w = student.shape
    bt = _pick_bt(b)
    # Single NCHW -> channel-major transpose per input; everything downstream stays
    # channel-major / [B, C, N] with no further layout churn.
    teacher_cm = jnp.transpose(teacher, (1, 0, 2, 3))
    student_cm = jnp.transpose(student, (1, 0, 2, 3))
    if c != 6:
        teacher_cm = conv2d_cm(teacher_cm, params["down_w"], bias=None, stride=1,
                               bn_scale=params["bn_scale"],
                               bn_shift=params["bn_shift"], relu=True,
                               out_dtype=BF16)            # feeds the bf16 reduce GEMM
    Tmaps = region_forward(params["regionT"], teacher_cm, bt)
    Smaps = region_forward(params["regionS"], student_cm, bt)
    loss = jnp.float32(0.0)
    for t, s in zip(Tmaps, Smaps):
        loss = loss + pallas_vid(t, s, params["vid_w"], params["vid_b"],
                                 params["vid_log_scale"], bt)
    return loss


# ----------------------------------------------------------------------------
if __name__ == "__main__":
    key = jax.random.PRNGKey(0)
    channelT, sizeT, channelS, sizeS = 16, 8, 8, 8
    kp, kt, ks = jax.random.split(key, 3)

    params = init_sdgc(kp, channelT, sizeT, channelS, sizeS)
    teacher = jax.random.normal(kt, (2, channelT, sizeT, sizeT), F32)
    student = jax.random.normal(ks, (2, channelS, sizeS, sizeS), F32)

    loss = sdgc_forward(params, teacher, student)
    loss = jax.block_until_ready(loss)
    assert bool(jnp.isfinite(loss)), "loss is not finite"
    print("KERNEL_OK")
</pallas_src>

<mosaic_0001>
module attributes {stable_mosaic.version = 11 : i64} {
  func.func @kernel(%arg0: i32, %arg1: memref<8x16xbf16, #tpu.memory_space<vmem>>, %arg2: memref<16x128xbf16, #tpu.memory_space<vmem>>, %arg3: memref<8x1xf32, #tpu.memory_space<vmem>>, %arg4: memref<8x1xf32, #tpu.memory_space<vmem>>, %arg5: memref<8x128xbf16, #tpu.memory_space<vmem>>) attributes {dimension_semantics = [#tpu.dimension_semantics<parallel>], iteration_bounds = array<i64: 1>, scalar_prefetch = 0 : i64, scratch_operands = 0 : i64, tpu.core_type = #tpu.core_type<tc>, window_params = [{pipeline_mode = #tpu.pipeline_mode<synchronous>, transform_indices = @transform_0, window_bounds = array<i64: 8, 16>}, {transform_indices = @transform_1, window_bounds = array<i64: 16, 128>}, {pipeline_mode = #tpu.pipeline_mode<synchronous>, transform_indices = @transform_2, window_bounds = array<i64: 8, 1>}, {pipeline_mode = #tpu.pipeline_mode<synchronous>, transform_indices = @transform_3, window_bounds = array<i64: 8, 1>}, {transform_indices = @transform_4, window_bounds = array<i64: 8, 128>}]} {
    %c0 = arith.constant 0 : index
    %c0_0 = arith.constant 0 : index
    %0 = vector.load %arg1[%c0, %c0_0] : memref<8x16xbf16, #tpu.memory_space<vmem>>, vector<8x16xbf16>
    %c0_1 = arith.constant 0 : index
    %c0_2 = arith.constant 0 : index
    %1 = vector.load %arg2[%c0_1, %c0_2] : memref<16x128xbf16, #tpu.memory_space<vmem>>, vector<16x128xbf16>
    %cst = arith.constant dense<0.000000e+00> : vector<8x128xf32>
    %2 = tpu.matmul %0, %1, %cst {dimension_numbers = #tpu.dot_dimension_numbers<[1], [0], [0], [1], [0, 0, 1, 1], [], []>} : vector<8x16xbf16>, vector<16x128xbf16>, vector<8x128xf32> -> vector<8x128xf32>
    %c0_3 = arith.constant 0 : index
    %c0_4 = arith.constant 0 : index
    %3 = vector.load %arg3[%c0_3, %c0_4] : memref<8x1xf32, #tpu.memory_space<vmem>>, vector<8x1xf32>
    %4 = vector.broadcast %3 : vector<8x1xf32> to vector<8x128xf32>
    %5 = arith.mulf %2, %4 : vector<8x128xf32>
    %c0_5 = arith.constant 0 : index
    %c0_6 = arith.constant 0 : index
    %6 = vector.load %arg4[%c0_5, %c0_6] : memref<8x1xf32, #tpu.memory_space<vmem>>, vector<8x1xf32>
    %7 = vector.broadcast %6 : vector<8x1xf32> to vector<8x128xf32>
    %8 = arith.addf %5, %7 : vector<8x128xf32>
    %cst_7 = arith.constant 0.000000e+00 : f32
    %9 = vector.broadcast %cst_7 : f32 to vector<8x128xf32>
    %10 = arith.maximumf %8, %9 : vector<8x128xf32>
    %11 = arith.truncf %10 : vector<8x128xf32> to vector<8x128xbf16>
    %c0_8 = arith.constant 0 : index
    %c0_9 = arith.constant 0 : index
    %12 = vector.load %arg5[%c0_8, %c0_9] : memref<8x128xbf16, #tpu.memory_space<vmem>>, vector<8x128xbf16>
    tpu.vector_store %arg5[%c0_8, %c0_9], %11 {strides = array<i32>} : memref<8x128xbf16, #tpu.memory_space<vmem>>, vector<8x128xbf16>,
    return
  }
  func.func @transform_0(%arg0: i32) -> (i32, i32) {
    %c0_i32 = arith.constant 0 : i32
    %c0_i32_0 = arith.constant 0 : i32
    %c0_i32_1 = arith.constant 0 : i32
    return %c0_i32, %c0_i32_0 : i32, i32
  }
  func.func @transform_1(%arg0: i32) -> (i32, i32) {
    %c0_i32 = arith.constant 0 : i32
    %c0_i32_0 = arith.constant 0 : i32
    return %c0_i32, %arg0 : i32, i32
  }
  func.func @transform_2(%arg0: i32) -> (i32, i32) {
    %c0_i32 = arith.constant 0 : i32
    %c0_i32_0 = arith.constant 0 : i32
    %c0_i32_1 = arith.constant 0 : i32
    return %c0_i32, %c0_i32_0 : i32, i32
  }
  func.func @transform_3(%arg0: i32) -> (i32, i32) {
    %c0_i32 = arith.constant 0 : i32
    %c0_i32_0 = arith.constant 0 : i32
    %c0_i32_1 = arith.constant 0 : i32
    return %c0_i32, %c0_i32_0 : i32, i32
  }
  func.func @transform_4(%arg0: i32) -> (i32, i32) {
    %c0_i32 = arith.constant 0 : i32
    %c0_i32_0 = arith.constant 0 : i32
    return %c0_i32, %arg0 : i32, i32
  }
}

</mosaic_0001>

<llo_original>
// kernel: tpu_custom_call.1
$region0: #{tpu_custom_call.1}
  #allocation0 [shape = 'u32[]', space=smem, size = 0x4, offset = 0x4, fixed_abs, tag = 'smem constant byte address 0x4 - core index']
  #allocation1 [shape = 'u32[144,128]{1,0:T(1,128)}', space=vmem, size = 0x12000, scoped, tag = 'internal scratch']
  %s0 = inlined_call_operand.vmem [shape: bf16[8,16], index: 0, kind: input, shape index: {}]
  %s1 = inlined_call_operand.vmem [shape: bf16[16,128], index: 1, kind: input, shape index: {}]
  %s2 = inlined_call_operand.vmem [shape: f32[8,1], index: 2, kind: input, shape index: {}]
  %s3 = inlined_call_operand.vmem [shape: f32[8,1], index: 3, kind: input, shape index: {}]
  %s4 = inlined_call_operand.hbm [shape: bf16[8,128], index: 4, kind: output, shape index: {}]
  %s5 = sld [smem:[#allocation0]]
  $region26: #{tpu_custom_call.1} parent=0
    _
  %s7 = ssub.s32 1, %s5
  %s8 = scalar_select 0, %s7, %s5
  $region1: #{tpu_custom_call.1} parent=0
    #allocation2 [shape = 'u8[2048]{0}', space=vmem, size = 0x800, scoped, tag = 'output window, operand 0, single buffered']
    #allocation3 [shape = 's32[1]{0}', space=sflag, size = 0x4, scoped, tag = 'scoped memory for tpu_custom_call.1']
    %9 = vsyncpa [#allocation3], 0
    // Predicated region
    $region2: #{tpu_custom_call.1} parent=1 // pred_check
      _
    $region3: #{tpu_custom_call.1} parent=1 // pred_check_branch
      %11 = sbr.rel (0) target = $region5
    $region4: #{tpu_custom_call.1} parent=1 // pred_region
      _
    $region5: #{tpu_custom_call.1} parent=1 // pred_fallthru
      _
    // Predicated region
    $region6: #{tpu_custom_call.1} parent=1 // pred_check
      _
    $region7: #{tpu_custom_call.1} parent=1 // pred_check_branch
      %13 = sbr.rel (0) target = $region9
    $region8: #{tpu_custom_call.1} parent=1 // pred_region
      _
    $region9: #{tpu_custom_call.1} parent=1 // pred_fallthru
      _
    // Predicated region
    $region10: #{tpu_custom_call.1} parent=1 // pred_check
      _
    $region11: #{tpu_custom_call.1} parent=1 // pred_check_branch
      %15 = sbr.rel (0) target = $region13
    $region12: #{tpu_custom_call.1} parent=1 // pred_region
      _
    $region13: #{tpu_custom_call.1} parent=1 // pred_fallthru
      _
    // Predicated region
    $region14: #{tpu_custom_call.1} parent=1 // pred_check
      _
    $region15: #{tpu_custom_call.1} parent=1 // pred_check_branch
      %17 = sbr.rel (0) target = $region17
    $region16: #{tpu_custom_call.1} parent=1 // pred_region
      _
    $region17: #{tpu_custom_call.1} parent=1 // pred_fallthru
      _
    %v19 = vld [vmem:[%s0] sm:$0xf]
    %v20 = vld [vmem:[%s1] sm:$0xf]
    %v21 = vld [vmem:[%s1 + $0x4] sm:$0xf]
    %v24 = vunpack.c.l.b16 %v20
    %v25 = vunpack.c.l.b16 %v21
    %v26 = vpack.c.b16 %v25, %v24
    %vm28 = vcmask 130048
    %v30 = vsel %vm28, %v19, 0
    %32 = vmatprep.subr.bf16.mxu0 0
    %33 = vmatpush1.bf16.msra.mxu0 0
    %34 = vmatprep.subr.bf16.mxu0 0
    %35 = vmatpush1.bf16.msra.mxu0 0
    %36 = vmatprep.subr.bf16.mxu0 0
    %37 = vmatpush1.bf16.msra.mxu0 0
    %38 = vmatprep.subr.bf16.mxu0 0
    %39 = vmatpush1.bf16.msra.mxu0 0
    %40 = vmatprep.subr.bf16.mxu0 0
    %41 = vmatpush1.bf16.msra.mxu0 0
    %42 = vmatprep.subr.bf16.mxu0 0
    %43 = vmatpush1.bf16.msra.mxu0 0
    %44 = vmatprep.subr.bf16.mxu0 0
    %45 = vmatpush1.bf16.msra.mxu0 0
    %46 = vmatprep.subr.bf16.mxu0 0
    %47 = vmatpush1.bf16.msra.mxu0 %v26
    %48 = vmatprep.subr.bf16.mxu0 0
    %49 = vmatpush2.bf16.msra.mxu0 0
    %50 = vmatprep.subr.bf16.mxu0 0
    %51 = vmatpush2.bf16.msra.mxu0 0
    %52 = vmatprep.subr.bf16.mxu0 0
    %53 = vmatpush2.bf16.msra.mxu0 0
    %54 = vmatprep.subr.bf16.mxu0 0
    %55 = vmatpush2.bf16.msra.mxu0 0
    %56 = vmatprep.subr.bf16.mxu0 0
    %57 = vmatpush2.bf16.msra.mxu0 0
    %58 = vmatprep.subr.bf16.mxu0 0
    %59 = vmatpush2.bf16.msra.mxu0 0
    %60 = vmatprep.subr.bf16.mxu0 0
    %61 = vmatpush2.bf16.msra.mxu0 0
    %62 = vmatprep.subr.bf16.mxu0 0
    %63 = vmatpush2.bf16.msra.mxu0 0
    %64 = vmatprep.mubr.bf16.mxu0 0
    %65 = vmatmul.mubr.bf16.gmra.mxu0 %v30
    %v66 = vpop.f32.mrf.mxu0
    %v67 = vadd.f32 0.0, %v66
    %v68 = vpop.f32.mrf.mxu0
    %v69 = vpop.f32.mrf.mxu0
    %v70 = vpop.f32.mrf.mxu0
    %71 = vdwg.mxu0
    %v72 = vld [vmem:[%s2] sm:$0xff]
    %74 = vset.pattern.permute.xlu0 0
    %75 = vperm.xlu0 %74, %v72
    %v76 = vpop.permute.xlu0 %75
    %v78 = vmul.f32 %v67, %v76
    %v79 = vld [vmem:[%s3] sm:$0xff]
    %81 = vset.pattern.permute.xlu0 0
    %82 = vperm.xlu0 %81, %v79
    %v83 = vpop.permute.xlu0 %82
    %v85 = vadd.f32 %v78, %v83
    %v86 = vmax.f32 %v85, 0.0
    %v87 = vpack.c.bf16 %v86, %v86
    %88 = vst [vmem:[#allocation2] sm:$0xf] %v87
    // Predicated region
    $region18: #{tpu_custom_call.1} parent=1 // pred_check
      _
    $region19: #{tpu_custom_call.1} parent=1 // pred_check_branch
      %90 = sbr.rel (0) target = $region21
    $region20: #{tpu_custom_call.1} parent=1 // pred_region
      %s92 = ssub.s32 64, 64
      %93 = vsyncadd [#allocation3], %s92
      %s95 = sshll.u32 [#allocation2], 4
      %s96 = int_to_ptr.vmem [resolvable:$true] %s95
      %98 = dma.vmem_to_hbm [thread:$0]  %s96, 64, %s4, [#allocation3]
    $region21: #{tpu_custom_call.1} parent=1 // pred_fallthru
      _
    // Predicated region
    $region22: #{tpu_custom_call.1} parent=1 // pred_check
      _
    $region23: #{tpu_custom_call.1} parent=1 // pred_check_branch
      %100 = sbr.rel (0) target = $region25
    $region24: #{tpu_custom_call.1} parent=1 // pred_region
      %101 = dma.done [#allocation3], 64
    $region25: #{tpu_custom_call.1} parent=1 // pred_fallthru
      _
    %102 = vsyncpa [#allocation3], 1

</llo_original>
